<compile_context>
chip_gen: v7x
topology: tpu7x:2x2x1
jax: 0.10.0
libtpu: 0.0.40
codegen_flags: <defaults>
</compile_context>

<pallas_src>
import jax
import jax.numpy as jnp
from jax.experimental import pallas as pl
from jax.experimental.pallas import tpu as pltpu


def lora_linear_kernel(x_ref, w_ref, a_ref, b_ref, o_ref, acc_ref, xa_ref):
    # x_ref: (tm, tk)  w_ref: (tk, tn)  a_ref: (tk, r)  b_ref: (r, tn)
    # acc_ref: (tm, tn) f32   xa_ref: (tm, r) f32
    k = pl.program_id(2)

    @pl.when(k == 0)
    def _():
        acc_ref[...] = jnp.zeros_like(acc_ref)
        xa_ref[...] = jnp.zeros_like(xa_ref)

    x = x_ref[...]
    # Main path partial: x_tile @ W_tile   (NN matmul, no transpose)
    acc_ref[...] += jnp.dot(x, w_ref[...], preferred_element_type=jnp.float32)
    # LoRA path partial: x_tile @ A_tile  -> (tm, r)
    xa_ref[...] += jnp.dot(x, a_ref[...], preferred_element_type=jnp.float32)

    @pl.when(k == pl.num_programs(2) - 1)
    def _():
        # Rank-r second matmul happens once per output tile (scaling is
        # already folded into b_ref by the wrapper).
        lora = jnp.dot(xa_ref[...], b_ref[...],
                       preferred_element_type=jnp.float32)
        o_ref[...] = (acc_ref[...] + lora).astype(o_ref.dtype)


def lora_linear(x2d, weight, lora_A, lora_B, scaling, *, tm=256, tn=256, tk=512):
    """x2d: (M, K); weight: (N, K); lora_A: (r, K); lora_B: (N, r) -> (M, N)."""
    M, K = x2d.shape
    N, _ = weight.shape
    r = lora_A.shape[0]

    # Clamp default tiles to the problem size (keeps small test shapes legal
    # while defaulting to 256-aligned MXU-sized tiles on realistic shapes).
    tm = min(tm, M)
    tn = min(tn, N)
    tk = min(tk, K)
    assert M % tm == 0 and N % tn == 0 and K % tk == 0, "tiles must divide dims"
    # (8,128) layout: sublane dim multiple of 8 for f32 (16 for bf16).
    assert tm % 8 == 0 or tm == M
    assert tn % 128 == 0 or tn == N

    # One-time layout plumbing in the wrapper (no in-kernel transposes):
    w_t = weight.T                          # (K, N)
    a_t = lora_A.T                          # (K, r)
    b_t = (scaling * lora_B).T              # (r, N), scaling folded in

    grid = (M // tm, N // tn, K // tk)

    flops = 2 * M * N * K + 2 * M * K * r + 2 * M * r * N
    bytes_accessed = 4 * (M * K + K * N + K * r + r * N + M * N)
    cost = pl.CostEstimate(flops=flops, transcendentals=0,
                           bytes_accessed=bytes_accessed)

    return pl.pallas_call(
        lora_linear_kernel,
        out_shape=jax.ShapeDtypeStruct((M, N), x2d.dtype),
        grid_spec=pltpu.PrefetchScalarGridSpec(
            num_scalar_prefetch=0,
            grid=grid,
            in_specs=[
                pl.BlockSpec((tm, tk), lambda i, j, k: (i, k)),  # x tile
                pl.BlockSpec((tk, tn), lambda i, j, k: (k, j)),  # W.T tile
                pl.BlockSpec((tk, r), lambda i, j, k: (k, 0)),   # A.T tile
                pl.BlockSpec((r, tn), lambda i, j, k: (0, j)),   # (s*B).T tile
            ],
            out_specs=pl.BlockSpec((tm, tn), lambda i, j, k: (i, j)),
            scratch_shapes=[
                pltpu.VMEM((tm, tn), jnp.float32),  # main accumulator
                pltpu.VMEM((tm, r), jnp.float32),   # LoRA xa accumulator
            ],
        ),
        compiler_params=pltpu.CompilerParams(
            dimension_semantics=("parallel", "parallel", "arbitrary"),
            vmem_limit_bytes=32 * 1024 * 1024,  # sized against v7x's 64 MiB VMEM
        ),
        cost_estimate=cost,
    )(x2d, w_t, a_t, b_t)


if __name__ == "__main__":
    # LORA_CONFIG
    r, alpha = 8, 32
    scaling = alpha / r  # 4.0

    batch, seq = 2, 8
    in_features, out_features = 128, 256

    key = jax.random.PRNGKey(0)
    kx, kw, ka, kb = jax.random.split(key, 4)

    # Deterministic synthetic init (kaiming-uniform-like bounds).  NOTE: the
    # PyTorch module zero-inits lora_B; we use small random values instead so
    # the LoRA path actually exercises the kernel.
    bound_w = 1.0 / (in_features ** 0.5)
    weight = jax.random.uniform(kw, (out_features, in_features),
                                jnp.float32, -bound_w, bound_w)
    lora_A = jax.random.uniform(ka, (r, in_features),
                                jnp.float32, -bound_w, bound_w)
    lora_B = jax.random.uniform(kb, (out_features, r),
                                jnp.float32, -0.01, 0.01)

    x = jax.random.normal(kx, (batch, seq, in_features), jnp.float32)

    x2d = x.reshape(batch * seq, in_features)
    y2d = lora_linear(x2d, weight, lora_A, lora_B, scaling)
    y = y2d.reshape(batch, seq, out_features)
    jax.block_until_ready(y)

    # Pure-JAX reference for the exact forward semantics (eval-mode dropout).
    ref = (x @ weight.T) + scaling * ((x @ lora_A.T) @ lora_B.T)

    assert y.shape == (batch, seq, out_features)
    assert jnp.allclose(y, ref, atol=1e-4, rtol=1e-4), "mismatch vs reference"
    print("KERNEL_OK")
</pallas_src>

<mosaic_0001>
module attributes {stable_mosaic.version = 11 : i64} {
  func.func @lora_linear_kernel(%arg0: i32, %arg1: i32, %arg2: i32, %arg3: memref<16x128xf32, #tpu.memory_space<vmem>>, %arg4: memref<128x256xf32, #tpu.memory_space<vmem>>, %arg5: memref<128x8xf32, #tpu.memory_space<vmem>>, %arg6: memref<8x256xf32, #tpu.memory_space<vmem>>, %arg7: memref<16x256xf32, #tpu.memory_space<vmem>>, %arg8: memref<16x256xf32, #tpu.memory_space<vmem>>, %arg9: memref<16x8xf32, #tpu.memory_space<vmem>>) attributes {dimension_semantics = [#tpu.dimension_semantics<parallel>, #tpu.dimension_semantics<parallel>, #tpu.dimension_semantics<arbitrary>], iteration_bounds = array<i64: 1, 1, 1>, scalar_prefetch = 0 : i64, scratch_operands = 2 : i64, tpu.core_type = #tpu.core_type<tc>, window_params = [{transform_indices = @transform_0, window_bounds = array<i64: 16, 128>}, {transform_indices = @transform_1, window_bounds = array<i64: 128, 256>}, {transform_indices = @transform_2, window_bounds = array<i64: 128, 8>}, {transform_indices = @transform_3, window_bounds = array<i64: 8, 256>}, {transform_indices = @transform_4, window_bounds = array<i64: 16, 256>}]} {
    %c0_i32 = arith.constant 0 : i32
    %0 = arith.cmpi eq, %arg2, %c0_i32 : i32
    %1 = arith.extui %0 : i1 to i32
    %c0_i32_0 = arith.constant 0 : i32
    %2 = arith.cmpi ne, %1, %c0_i32_0 : i32
    scf.if %2 {
      %cst_17 = arith.constant 0.000000e+00 : f32
      %17 = vector.broadcast %cst_17 : f32 to vector<16x256xf32>
      %c0_18 = arith.constant 0 : index
      %c0_19 = arith.constant 0 : index
      %18 = vector.load %arg8[%c0_18, %c0_19] : memref<16x256xf32, #tpu.memory_space<vmem>>, vector<16x256xf32>
      tpu.vector_store %arg8[%c0_18, %c0_19], %17 {strides = array<i32>} : memref<16x256xf32, #tpu.memory_space<vmem>>, vector<16x256xf32>,
      %cst_20 = arith.constant 0.000000e+00 : f32
      %19 = vector.broadcast %cst_20 : f32 to vector<16x8xf32>
      %c0_21 = arith.constant 0 : index
      %c0_22 = arith.constant 0 : index
      %20 = vector.load %arg9[%c0_21, %c0_22] : memref<16x8xf32, #tpu.memory_space<vmem>>, vector<16x8xf32>
      tpu.vector_store %arg9[%c0_21, %c0_22], %19 {strides = array<i32>} : memref<16x8xf32, #tpu.memory_space<vmem>>, vector<16x8xf32>,
    } else {
    }
    %c0 = arith.constant 0 : index
    %c0_1 = arith.constant 0 : index
    %3 = vector.load %arg3[%c0, %c0_1] : memref<16x128xf32, #tpu.memory_space<vmem>>, vector<16x128xf32>
    %c0_2 = arith.constant 0 : index
    %c0_3 = arith.constant 0 : index
    %4 = vector.load %arg8[%c0_2, %c0_3] : memref<16x256xf32, #tpu.memory_space<vmem>>, vector<16x256xf32>
    %c0_4 = arith.constant 0 : index
    %c0_5 = arith.constant 0 : index
    %5 = vector.load %arg4[%c0_4, %c0_5] : memref<128x256xf32, #tpu.memory_space<vmem>>, vector<128x256xf32>
    %cst = arith.constant dense<0.000000e+00> : vector<16x256xf32>
    %6 = tpu.matmul %3, %5, %cst {dimension_numbers = #tpu.dot_dimension_numbers<[1], [0], [0], [1], [0, 0, 1, 1], [], []>} : vector<16x128xf32>, vector<128x256xf32>, vector<16x256xf32> -> vector<16x256xf32>
    %7 = arith.addf %4, %6 : vector<16x256xf32>
    %c0_6 = arith.constant 0 : index
    %c0_7 = arith.constant 0 : index
    %8 = vector.load %arg8[%c0_6, %c0_7] : memref<16x256xf32, #tpu.memory_space<vmem>>, vector<16x256xf32>
    tpu.vector_store %arg8[%c0_6, %c0_7], %7 {strides = array<i32>} : memref<16x256xf32, #tpu.memory_space<vmem>>, vector<16x256xf32>,
    %c0_8 = arith.constant 0 : index
    %c0_9 = arith.constant 0 : index
    %9 = vector.load %arg9[%c0_8, %c0_9] : memref<16x8xf32, #tpu.memory_space<vmem>>, vector<16x8xf32>
    %c0_10 = arith.constant 0 : index
    %c0_11 = arith.constant 0 : index
    %10 = vector.load %arg5[%c0_10, %c0_11] : memref<128x8xf32, #tpu.memory_space<vmem>>, vector<128x8xf32>
    %cst_12 = arith.constant dense<0.000000e+00> : vector<16x8xf32>
    %11 = tpu.matmul %3, %10, %cst_12 {dimension_numbers = #tpu.dot_dimension_numbers<[1], [0], [0], [1], [0, 0, 1, 1], [], []>} : vector<16x128xf32>, vector<128x8xf32>, vector<16x8xf32> -> vector<16x8xf32>
    %12 = arith.addf %9, %11 : vector<16x8xf32>
    %c0_13 = arith.constant 0 : index
    %c0_14 = arith.constant 0 : index
    %13 = vector.load %arg9[%c0_13, %c0_14] : memref<16x8xf32, #tpu.memory_space<vmem>>, vector<16x8xf32>
    tpu.vector_store %arg9[%c0_13, %c0_14], %12 {strides = array<i32>} : memref<16x8xf32, #tpu.memory_space<vmem>>, vector<16x8xf32>,
    %c0_i32_15 = arith.constant 0 : i32
    %14 = arith.cmpi eq, %arg2, %c0_i32_15 : i32
    %15 = arith.extui %14 : i1 to i32
    %c0_i32_16 = arith.constant 0 : i32
    %16 = arith.cmpi ne, %15, %c0_i32_16 : i32
    scf.if %16 {
      %c0_17 = arith.constant 0 : index
      %c0_18 = arith.constant 0 : index
      %17 = vector.load %arg9[%c0_17, %c0_18] : memref<16x8xf32, #tpu.memory_space<vmem>>, vector<16x8xf32>
      %c0_19 = arith.constant 0 : index
      %c0_20 = arith.constant 0 : index
      %18 = vector.load %arg6[%c0_19, %c0_20] : memref<8x256xf32, #tpu.memory_space<vmem>>, vector<8x256xf32>
      %cst_21 = arith.constant dense<0.000000e+00> : vector<16x256xf32>
      %19 = tpu.matmul %17, %18, %cst_21 {dimension_numbers = #tpu.dot_dimension_numbers<[1], [0], [0], [1], [0, 0, 1, 1], [], []>} : vector<16x8xf32>, vector<8x256xf32>, vector<16x256xf32> -> vector<16x256xf32>
      %c0_22 = arith.constant 0 : index
      %c0_23 = arith.constant 0 : index
      %20 = vector.load %arg8[%c0_22, %c0_23] : memref<16x256xf32, #tpu.memory_space<vmem>>, vector<16x256xf32>
      %21 = arith.addf %20, %19 : vector<16x256xf32>
      %c0_24 = arith.constant 0 : index
      %c0_25 = arith.constant 0 : index
      %22 = vector.load %arg7[%c0_24, %c0_25] : memref<16x256xf32, #tpu.memory_space<vmem>>, vector<16x256xf32>
      tpu.vector_store %arg7[%c0_24, %c0_25], %21 {strides = array<i32>} : memref<16x256xf32, #tpu.memory_space<vmem>>, vector<16x256xf32>,
    } else {
    }
    return
  }
  func.func @transform_0(%arg0: i32, %arg1: i32, %arg2: i32) -> (i32, i32) {
    %c0_i32 = arith.constant 0 : i32
    return %arg0, %arg2 : i32, i32
  }
  func.func @transform_1(%arg0: i32, %arg1: i32, %arg2: i32) -> (i32, i32) {
    %c0_i32 = arith.constant 0 : i32
    return %arg2, %arg1 : i32, i32
  }
  func.func @transform_2(%arg0: i32, %arg1: i32, %arg2: i32) -> (i32, i32) {
    %c0_i32 = arith.constant 0 : i32
    %c0_i32_0 = arith.constant 0 : i32
    return %arg2, %c0_i32 : i32, i32
  }
  func.func @transform_3(%arg0: i32, %arg1: i32, %arg2: i32) -> (i32, i32) {
    %c0_i32 = arith.constant 0 : i32
    %c0_i32_0 = arith.constant 0 : i32
    return %c0_i32, %arg1 : i32, i32
  }
  func.func @transform_4(%arg0: i32, %arg1: i32, %arg2: i32) -> (i32, i32) {
    %c0_i32 = arith.constant 0 : i32
    return %arg0, %arg1 : i32, i32
  }
}

</mosaic_0001>

<llo_original>
// kernel: tpu_custom_call.1
$region0: #{tpu_custom_call.1}
  #allocation0 [shape = 'u32[]', space=smem, size = 0x4, offset = 0x4, fixed_abs, tag = 'smem constant byte address 0x4 - core index']
  #allocation1 [shape = 'u32[144,128]{1,0:T(1,128)}', space=vmem, size = 0x12000, scoped, tag = 'internal scratch']
  #allocation2 [shape = 'f32[16,256]{1,0:T(8,128)}', space=vmem, size = 0x4000, scoped, tag = 'scratch operand']
  #allocation3 [shape = 'f32[16,8]{1,0:T(8,128)}', space=vmem, size = 0x2000, scoped, tag = 'scratch operand']
  %s0 = inlined_call_operand.vmem [shape: f32[16,128], index: 0, kind: input, shape index: {}]
  %s1 = inlined_call_operand.hbm [shape: f32[128,256], index: 1, kind: input, shape index: {}]
  %s2 = inlined_call_operand.vmem [shape: f32[128,8], index: 2, kind: input, shape index: {}]
  %s3 = inlined_call_operand.vmem [shape: f32[8,256], index: 3, kind: input, shape index: {}]
  %s4 = inlined_call_operand.hbm [shape: f32[16,256], index: 4, kind: output, shape index: {}]
  %s5 = sld [smem:[#allocation0]]
  $region38: #{tpu_custom_call.1} parent=0
    _
  %s7 = ssub.s32 1, %s5
  %s8 = scalar_select 0, %s7, %s5
  $region1: #{tpu_custom_call.1} parent=0
    #allocation4 [shape = 'u8[131072]{0}', space=vmem, size = 0x20000, scoped, tag = 'input window, operand 1, single buffered']
    #allocation5 [shape = 's32[1]{0}', space=sflag, size = 0x4, scoped, tag = 'scoped memory for tpu_custom_call.1']
    #allocation6 [shape = 's32[1]{0}', space=sflag, size = 0x4, scoped, tag = 'scoped memory for tpu_custom_call.1']
    #allocation7 [shape = 'u8[16384]{0}', space=vmem, size = 0x4000, scoped, tag = 'output window, operand 0, single buffered']
    %9 = vsyncpa [#allocation5], 0
    %10 = vsyncpa [#allocation6], 0
    // Predicated region
    $region2: #{tpu_custom_call.1} parent=1 // pred_check
      _
    $region3: #{tpu_custom_call.1} parent=1 // pred_check_branch
      %12 = sbr.rel (0) target = $region5
    $region4: #{tpu_custom_call.1} parent=1 // pred_region
      _
    $region5: #{tpu_custom_call.1} parent=1 // pred_fallthru
      _
    // Predicated region
    $region6: #{tpu_custom_call.1} parent=1 // pred_check
      _
    $region7: #{tpu_custom_call.1} parent=1 // pred_check_branch
      %14 = sbr.rel (0) target = $region9
    $region8: #{tpu_custom_call.1} parent=1 // pred_region
      %s16 = ssub.s32 4096, 4096
      %17 = vsyncadd [#allocation5], %s16
      %s18 = sshll.u32 [#allocation4], 4
      %s19 = int_to_ptr.vmem [resolvable:$true] %s18
      %24 = dma.hbm_to_vmem [thread:$0]  %s1, 4096, %s19, [#allocation5], 256, 256, 16
    $region9: #{tpu_custom_call.1} parent=1 // pred_fallthru
      _
    // Predicated region
    $region10: #{tpu_custom_call.1} parent=1 // pred_check
      _
    $region11: #{tpu_custom_call.1} parent=1 // pred_check_branch
      %26 = sbr.rel (0) target = $region13
    $region12: #{tpu_custom_call.1} parent=1 // pred_region
      _
    $region13: #{tpu_custom_call.1} parent=1 // pred_fallthru
      _
    // Predicated region
    $region14: #{tpu_custom_call.1} parent=1 // pred_check
      _
    $region15: #{tpu_custom_call.1} parent=1 // pred_check_branch
      %28 = sbr.rel (0) target = $region17
    $region16: #{tpu_custom_call.1} parent=1 // pred_region
      _
    $region17: #{tpu_custom_call.1} parent=1 // pred_fallthru
      _
    // Predicated region
    $region18: #{tpu_custom_call.1} parent=1 // pred_check
      _
    $region19: #{tpu_custom_call.1} parent=1 // pred_check_branch
      %30 = sbr.rel (0) target = $region21
    $region20: #{tpu_custom_call.1} parent=1 // pred_region
      %31 = dma.done [#allocation5], 4096
    $region21: #{tpu_custom_call.1} parent=1 // pred_fallthru
      _
    %p32 = scmp.eq.s32.totalorder 0, 0
    // Predicated region
    $region22: #{tpu_custom_call.1} parent=1 // pred_check
      %p33 = pneg %p32
    $region23: #{tpu_custom_call.1} parent=1 // pred_check_branch
      %35 = sbr.rel (%p33) target = $region25
    $region24: #{tpu_custom_call.1} parent=1 // pred_region
      %36 = vst [vmem:[#allocation2] sm:$0xff] 0.0
      %37 = vst [vmem:[#allocation2 + $0x8] sm:$0xff] 0.0
      %38 = vst [vmem:[#allocation2 + $0x10] sm:$0xff] 0.0
      %39 = vst [vmem:[#allocation2 + $0x18] sm:$0xff] 0.0
      %vm40 = vcmask 64512
      %41 = vst.msk [vmem:[#allocation3] sm:$0xff] %vm40, 0.0
      %42 = vst.msk [vmem:[#allocation3 + $0x8] sm:$0xff] %vm40, 0.0
    $region25: #{tpu_custom_call.1} parent=1 // pred_fallthru
      _
    %v43 = vld [vmem:[%s0] sm:$0xff]
    %v44 = vld [vmem:[%s0 + $0x8] sm:$0xff]
    %v45 = vld [vmem:[#allocation2] sm:$0xff]
    %v46 = vld [vmem:[#allocation2 + $0x8] sm:$0xff]
    %v47 = vld [vmem:[#allocation2 + $0x10] sm:$0xff]
    %v48 = vld [vmem:[#allocation2 + $0x18] sm:$0xff]
    %v49 = vld [vmem:[#allocation4] sm:$0xff]
    %v50 = vld [vmem:[#allocation4 + $0x8] sm:$0xff]
    %v51 = vld [vmem:[#allocation4 + $0x10] sm:$0xff]
    %v52 = vld [vmem:[#allocation4 + $0x18] sm:$0xff]
    %v53 = vld [vmem:[#allocation4 + $0x20] sm:$0xff]
    %v54 = vld [vmem:[#allocation4 + $0x28] sm:$0xff]
    %v55 = vld [vmem:[#allocation4 + $0x30] sm:$0xff]
    %v56 = vld [vmem:[#allocation4 + $0x38] sm:$0xff]
    %v57 = vld [vmem:[#allocation4 + $0x40] sm:$0xff]
    %v58 = vld [vmem:[#allocation4 + $0x48] sm:$0xff]
    %v59 = vld [vmem:[#allocation4 + $0x50] sm:$0xff]
    %v60 = vld [vmem:[#allocation4 + $0x58] sm:$0xff]
    %v61 = vld [vmem:[#allocation4 + $0x60] sm:$0xff]
    %v62 = vld [vmem:[#allocation4 + $0x68] sm:$0xff]
    %v63 = vld [vmem:[#allocation4 + $0x70] sm:$0xff]
    %v64 = vld [vmem:[#allocation4 + $0x78] sm:$0xff]
    %v65 = vld [vmem:[#allocation4 + $0x80] sm:$0xff]
    %v66 = vld [vmem:[#allocation4 + $0x88] sm:$0xff]
    %v67 = vld [vmem:[#allocation4 + $0x90] sm:$0xff]
    %v68 = vld [vmem:[#allocation4 + $0x98] sm:$0xff]
    %v69 = vld [vmem:[#allocation4 + $0xa0] sm:$0xff]
    %v70 = vld [vmem:[#allocation4 + $0xa8] sm:$0xff]
    %v71 = vld [vmem:[#allocation4 + $0xb0] sm:$0xff]
    %v72 = vld [vmem:[#allocation4 + $0xb8] sm:$0xff]
    %v73 = vld [vmem:[#allocation4 + $0xc0] sm:$0xff]
    %v74 = vld [vmem:[#allocation4 + $0xc8] sm:$0xff]
    %v75 = vld [vmem:[#allocation4 + $0xd0] sm:$0xff]
    %v76 = vld [vmem:[#allocation4 + $0xd8] sm:$0xff]
    %v77 = vld [vmem:[#allocation4 + $0xe0] sm:$0xff]
    %v78 = vld [vmem:[#allocation4 + $0xe8] sm:$0xff]
    %v79 = vld [vmem:[#allocation4 + $0xf0] sm:$0xff]
    %v80 = vld [vmem:[#allocation4 + $0xf8] sm:$0xff]
    %81 = vmatprep.subr.mxu0 %v50
    %82 = vmatpush1.msra.mxu0 %v49
    %83 = vmatprep.subr.mxu0 %v52
    %84 = vmatpush1.msra.mxu0 %v51
    %85 = vmatprep.subr.mxu0 %v54
    %86 = vmatpush1.msra.mxu0 %v53
    %87 = vmatprep.subr.mxu0 %v56
    %88 = vmatpush1.msra.mxu0 %v55
    %89 = vmatprep.subr.mxu0 %v58
    %90 = vmatpush1.msra.mxu0 %v57
    %91 = vmatprep.subr.mxu0 %v60
    %92 = vmatpush1.msra.mxu0 %v59
    %93 = vmatprep.subr.mxu0 %v62
    %94 = vmatpush1.msra.mxu0 %v61
    %95 = vmatprep.subr.mxu0 %v64
    %96 = vmatpush1.msra.mxu0 %v63
    %97 = vmatprep.subr.mxu0 %v66
    %98 = vmatpush1.msra.mxu0 %v65
    %99 = vmatprep.subr.mxu0 %v68
    %100 = vmatpush1.msra.mxu0 %v67
    %101 = vmatprep.subr.mxu0 %v70
    %102 = vmatpush1.msra.mxu0 %v69
    %103 = vmatprep.subr.mxu0 %v72
    %104 = vmatpush1.msra.mxu0 %v71
    %105 = vmatprep.subr.mxu0 %v74
    %106 = vmatpush1.msra.mxu0 %v73
    %107 = vmatprep.subr.mxu0 %v76
    %108 = vmatpush1.msra.mxu0 %v75
    %109 = vmatprep.subr.mxu0 %v78
    %110 = vmatpush1.msra.mxu0 %v77
    %111 = vmatprep.subr.mxu0 %v80
    %112 = vmatpush1.msra.mxu0 %v79
    %113 = vmatprep.subr.mxu0 0.0
    %114 = vmatpush1.msra.mxu0 0.0
    %115 = vmatprep.subr.mxu0 0.0
    %116 = vmatpush1.msra.mxu0 0.0
    %117 = vmatprep.subr.mxu0 0.0
    %118 = vmatpush1.msra.mxu0 0.0
    %119 = vmatprep.subr.mxu0 0.0
    %120 = vmatpush1.msra.mxu0 0.0
    %121 = vmatprep.subr.mxu0 0.0
    %122 = vmatpush1.msra.mxu0 0.0
    %123 = vmatprep.subr.mxu0 0.0
    %124 = vmatpush1.msra.mxu0 0.0
    %125 = vmatprep.subr.mxu0 0.0
    %126 = vmatpush1.msra.mxu0 0.0
    %127 = vmatprep.subr.mxu0 0.0
    %128 = vmatpush1.msra.mxu0 0.0
    %129 = vmatprep.subr.mxu0 0.0
    %130 = vmatpush1.msra.mxu0 0.0
    %131 = vmatprep.subr.mxu0 0.0
    %132 = vmatpush1.msra.mxu0 0.0
    %133 = vmatprep.subr.mxu0 0.0
    %134 = vmatpush1.msra.mxu0 0.0
    %135 = vmatprep.subr.mxu0 0.0
    %136 = vmatpush1.msra.mxu0 0.0
    %137 = vmatprep.subr.mxu0 0.0
    %138 = vmatpush1.msra.mxu0 0.0
    %139 = vmatprep.subr.mxu0 0.0
    %140 = vmatpush1.msra.mxu0 0.0
    %141 = vmatprep.subr.mxu0 0.0
    %142 = vmatpush1.msra.mxu0 0.0
    %143 = vmatprep.subr.mxu0 0.0
    %144 = vmatpush1.msra.mxu0 0.0
    %145 = vmatprep.mubr.f32.mxu0 0.0
    %146 = vmatmul.mubr.f32.gmra.mrb[0].mxu0 %v43
    %v147 = vpop.f32.mrb[0].mxu0
    %v148 = vadd.f32 0.0, %v147
    %v149 = vpop.f32.mrb[0].mxu0
    %v150 = vadd.f32 0.0, %v149
    %151 = vmatprep.mubr.f32.mxu0 0.0
    %152 = vmatmul.mubr.f32.gmra.mrb[0].mxu0 %v44
    %v153 = vpop.f32.mrb[0].mxu0
    %v154 = vadd.f32 0.0, %v153
    %v155 = vpop.f32.mrb[0].mxu0
    %v156 = vadd.f32 0.0, %v155
    %157 = vdwg.mxu0
    %v158 = vadd.f32 %v45, %v148
    %v159 = vadd.f32 %v46, %v150
    %v160 = vadd.f32 %v47, %v154
    %v161 = vadd.f32 %v48, %v156
    %162 = vst [vmem:[#allocation2] sm:$0xff] %v158
    %163 = vst [vmem:[#allocation2 + $0x8] sm:$0xff] %v159
    %164 = vst [vmem:[#allocation2 + $0x10] sm:$0xff] %v160
    %165 = vst [vmem:[#allocation2 + $0x18] sm:$0xff] %v161
    %v166 = vld [vmem:[#allocation3] sm:$0xff]
    %v167 = vld [vmem:[#allocation3 + $0x8] sm:$0xff]
    %v168 = vld [vmem:[%s2] sm:$0xff]
    %v169 = vld [vmem:[%s2 + $0x8] sm:$0xff]
    %v170 = vld [vmem:[%s2 + $0x10] sm:$0xff]
    %v171 = vld [vmem:[%s2 + $0x18] sm:$0xff]
    %v172 = vld [vmem:[%s2 + $0x20] sm:$0xff]
    %v173 = vld [vmem:[%s2 + $0x28] sm:$0xff]
    %v174 = vld [vmem:[%s2 + $0x30] sm:$0xff]
    %v175 = vld [vmem:[%s2 + $0x38] sm:$0xff]
    %v176 = vld [vmem:[%s2 + $0x40] sm:$0xff]
    %v177 = vld [vmem:[%s2 + $0x48] sm:$0xff]
    %v178 = vld [vmem:[%s2 + $0x50] sm:$0xff]
    %v179 = vld [vmem:[%s2 + $0x58] sm:$0xff]
    %v180 = vld [vmem:[%s2 + $0x60] sm:$0xff]
    %v181 = vld [vmem:[%s2 + $0x68] sm:$0xff]
    %v182 = vld [vmem:[%s2 + $0x70] sm:$0xff]
    %v183 = vld [vmem:[%s2 + $0x78] sm:$0xff]
    %184 = vmatprep.subr.mxu0 0.0
    %185 = vmatpush1.msra.mxu0 %v168
    %186 = vmatprep.subr.mxu0 0.0
    %187 = vmatpush1.msra.mxu0 %v169
    %188 = vmatprep.subr.mxu0 0.0
    %189 = vmatpush1.msra.mxu0 %v170
    %190 = vmatprep.subr.mxu0 0.0
    %191 = vmatpush1.msra.mxu0 %v171
    %192 = vmatprep.subr.mxu0 0.0
    %193 = vmatpush1.msra.mxu0 %v172
    %194 = vmatprep.subr.mxu0 0.0
    %195 = vmatpush1.msra.mxu0 %v173
    %196 = vmatprep.subr.mxu0 0.0
    %197 = vmatpush1.msra.mxu0 %v174
    %198 = vmatprep.subr.mxu0 0.0
    %199 = vmatpush1.msra.mxu0 %v175
    %200 = vmatprep.subr.mxu0 0.0
    %201 = vmatpush1.msra.mxu0 %v176
    %202 = vmatprep.subr.mxu0 0.0
    %203 = vmatpush1.msra.mxu0 %v177
    %204 = vmatprep.subr.mxu0 0.0
    %205 = vmatpush1.msra.mxu0 %v178
    %206 = vmatprep.subr.mxu0 0.0
    %207 = vmatpush1.msra.mxu0 %v179
    %208 = vmatprep.subr.mxu0 0.0
    %209 = vmatpush1.msra.mxu0 %v180
    %210 = vmatprep.subr.mxu0 0.0
    %211 = vmatpush1.msra.mxu0 %v181
    %212 = vmatprep.subr.mxu0 0.0
    %213 = vmatpush1.msra.mxu0 %v182
    %214 = vmatprep.subr.mxu0 0.0
    %215 = vmatpush1.msra.mxu0 %v183
    %216 = vmatprep.subr.mxu0 0.0
    %217 = vmatpush1.msra.mxu0 0.0
    %218 = vmatprep.subr.mxu0 0.0
    %219 = vmatpush1.msra.mxu0 0.0
    %220 = vmatprep.subr.mxu0 0.0
    %221 = vmatpush1.msra.mxu0 0.0
    %222 = vmatprep.subr.mxu0 0.0
    %223 = vmatpush1.msra.mxu0 0.0
    %224 = vmatprep.subr.mxu0 0.0
    %225 = vmatpush1.msra.mxu0 0.0
    %226 = vmatprep.subr.mxu0 0.0
    %227 = vmatpush1.msra.mxu0 0.0
    %228 = vmatprep.subr.mxu0 0.0
    %229 = vmatpush1.msra.mxu0 0.0
    %230 = vmatprep.subr.mxu0 0.0
    %231 = vmatpush1.msra.mxu0 0.0
    %232 = vmatprep.subr.mxu0 0.0
    %233 = vmatpush1.msra.mxu0 0.0
    %234 = vmatprep.subr.mxu0 0.0
    %235 = vmatpush1.msra.mxu0 0.0
    %236 = vmatprep.subr.mxu0 0.0
    %237 = vmatpush1.msra.mxu0 0.0
    %238 = vmatprep.subr.mxu0 0.0
    %239 = vmatpush1.msra.mxu0 0.0
    %240 = vmatprep.subr.mxu0 0.0
    %241 = vmatpush1.msra.mxu0 0.0
    %242 = vmatprep.subr.mxu0 0.0
    %243 = vmatpush1.msra.mxu0 0.0
    %244 = vmatprep.subr.mxu0 0.0
    %245 = vmatpush1.msra.mxu0 0.0
    %246 = vmatprep.subr.mxu0 0.0
    %247 = vmatpush1.msra.mxu0 0.0
    %248 = vmatprep.mubr.f32.mxu0 0.0
    %249 = vmatmul.mubr.f32.gmra.mrb[0].mxu0 %v43
    %v250 = vpop.f32.mrb[0].mxu0
    %v251 = vadd.f32 0.0, %v250
    %v252 = vpop.f32.mrb[0].mxu0
    %253 = vmatprep.mubr.f32.mxu0 0.0
    %254 = vmatmul.mubr.f32.gmra.mrb[0].mxu0 %v44
    %v255 = vpop.f32.mrb[0].mxu0
    %v256 = vadd.f32 0.0, %v255
    %v257 = vpop.f32.mrb[0].mxu0
    %258 = vdwg.mxu0
    %v259 = vadd.f32 %v166, %v251
    %v260 = vadd.f32 %v167, %v256
    %vm261 = vcmask 64512
    %262 = vst.msk [vmem:[#allocation3] sm:$0xff] %vm261, %v259
    %263 = vst.msk [vmem:[#allocation3 + $0x8] sm:$0xff] %vm261, %v260
    // Predicated region
    $region26: #{tpu_custom_call.1} parent=1 // pred_check
      %p264 = pneg %p32
    $region27: #{tpu_custom_call.1} parent=1 // pred_check_branch
      %266 = sbr.rel (%p264) target = $region29
    $region28: #{tpu_custom_call.1} parent=1 // pred_region
      %v267 = vld [vmem:[#allocation3] sm:$0xff]
      %v268 = vld [vmem:[#allocation3 + $0x8] sm:$0xff]
      %v269 = vld [vmem:[%s3] sm:$0xff]
      %v270 = vld [vmem:[%s3 + $0x8] sm:$0xff]
      %v272 = vsel %vm261, %v267, 0
      %v275 = vsel %vm261, %v268, 0
      %277 = vmatprep.subr.mxu0 %v270
      %278 = vmatpush1.msra.mxu0 %v269
      %279 = vmatprep.subr.mxu0 0.0
      %280 = vmatpush1.msra.mxu0 0.0
      %281 = vmatprep.subr.mxu0 0.0
      %282 = vmatpush1.msra.mxu0 0.0
      %283 = vmatprep.subr.mxu0 0.0
      %284 = vmatpush1.msra.mxu0 0.0
      %285 = vmatprep.subr.mxu0 0.0
      %286 = vmatpush1.msra.mxu0 0.0
      %287 = vmatprep.subr.mxu0 0.0
      %288 = vmatpush1.msra.mxu0 0.0
      %289 = vmatprep.subr.mxu0 0.0
      %290 = vmatpush1.msra.mxu0 0.0
      %291 = vmatprep.subr.mxu0 0.0
      %292 = vmatpush1.msra.mxu0 0.0
      %293 = vmatprep.subr.mxu0 0.0
      %294 = vmatpush1.msra.mxu0 0.0
      %295 = vmatprep.subr.mxu0 0.0
      %296 = vmatpush1.msra.mxu0 0.0
      %297 = vmatprep.subr.mxu0 0.0
      %298 = vmatpush1.msra.mxu0 0.0
      %299 = vmatprep.subr.mxu0 0.0
      %300 = vmatpush1.msra.mxu0 0.0
      %301 = vmatprep.subr.mxu0 0.0
      %302 = vmatpush1.msra.mxu0 0.0
      %303 = vmatprep.subr.mxu0 0.0
      %304 = vmatpush1.msra.mxu0 0.0
      %305 = vmatprep.subr.mxu0 0.0
      %306 = vmatpush1.msra.mxu0 0.0
      %307 = vmatprep.subr.mxu0 0.0
      %308 = vmatpush1.msra.mxu0 0.0
      %309 = vmatprep.subr.mxu0 0.0
      %310 = vmatpush1.msra.mxu0 0.0
      %311 = vmatprep.subr.mxu0 0.0
      %312 = vmatpush1.msra.mxu0 0.0
      %313 = vmatprep.subr.mxu0 0.0
      %314 = vmatpush1.msra.mxu0 0.0
      %315 = vmatprep.subr.mxu0 0.0
      %316 = vmatpush1.msra.mxu0 0.0
      %317 = vmatprep.subr.mxu0 0.0
      %318 = vmatpush1.msra.mxu0 0.0
      %319 = vmatprep.subr.mxu0 0.0
      %320 = vmatpush1.msra.mxu0 0.0
      %321 = vmatprep.subr.mxu0 0.0
      %322 = vmatpush1.msra.mxu0 0.0
      %323 = vmatprep.subr.mxu0 0.0
      %324 = vmatpush1.msra.mxu0 0.0
      %325 = vmatprep.subr.mxu0 0.0
      %326 = vmatpush1.msra.mxu0 0.0
      %327 = vmatprep.subr.mxu0 0.0
      %328 = vmatpush1.msra.mxu0 0.0
      %329 = vmatprep.subr.mxu0 0.0
      %330 = vmatpush1.msra.mxu0 0.0
      %331 = vmatprep.subr.mxu0 0.0
      %332 = vmatpush1.msra.mxu0 0.0
      %333 = vmatprep.subr.mxu0 0.0
      %334 = vmatpush1.msra.mxu0 0.0
      %335 = vmatprep.subr.mxu0 0.0
      %336 = vmatpush1.msra.mxu0 0.0
      %337 = vmatprep.subr.mxu0 0.0
      %338 = vmatpush1.msra.mxu0 0.0
      %339 = vmatprep.subr.mxu0 0.0
      %340 = vmatpush1.msra.mxu0 0.0
      %341 = vmatprep.mubr.f32.mxu0 0.0
      %342 = vmatmul.mubr.f32.gmra.mrb[0].mxu0 %v272
      %v343 = vpop.f32.mrb[0].mxu0
      %v344 = vadd.f32 0.0, %v343
      %v345 = vpop.f32.mrb[0].mxu0
      %v346 = vadd.f32 0.0, %v345
      %347 = vmatprep.mubr.f32.mxu0 0.0
      %348 = vmatmul.mubr.f32.gmra.mrb[0].mxu0 %v275
      %v349 = vpop.f32.mrb[0].mxu0
      %v350 = vadd.f32 0.0, %v349
      %v351 = vpop.f32.mrb[0].mxu0
      %v352 = vadd.f32 0.0, %v351
      %353 = vdwg.mxu0
      %v354 = vld [vmem:[#allocation2] sm:$0xff]
      %v355 = vld [vmem:[#allocation2 + $0x8] sm:$0xff]
      %v356 = vld [vmem:[#allocation2 + $0x10] sm:$0xff]
      %v357 = vld [vmem:[#allocation2 + $0x18] sm:$0xff]
      %v358 = vadd.f32 %v354, %v344
      %v359 = vadd.f32 %v355, %v346
      %v360 = vadd.f32 %v356, %v350
      %v361 = vadd.f32 %v357, %v352
      %362 = vst [vmem:[#allocation7] sm:$0xff] %v358
      %363 = vst [vmem:[#allocation7 + $0x8] sm:$0xff] %v359
      %364 = vst [vmem:[#allocation7 + $0x10] sm:$0xff] %v360
      %365 = vst [vmem:[#allocation7 + $0x18] sm:$0xff] %v361
    $region29: #{tpu_custom_call.1} parent=1 // pred_fallthru
      _
    // Predicated region
    $region30: #{tpu_custom_call.1} parent=1 // pred_check
      _
    $region31: #{tpu_custom_call.1} parent=1 // pred_check_branch
      %367 = sbr.rel (0) target = $region33
    $region32: #{tpu_custom_call.1} parent=1 // pred_region
      %s369 = ssub.s32 512, 512
      %370 = vsyncadd [#allocation6], %s369
      %s371 = sshll.u32 [#allocation7], 4
      %s372 = int_to_ptr.vmem [resolvable:$true] %s371
      %377 = dma.vmem_to_hbm [thread:$0]  %s372, 512, %s4, [#allocation6], 256, 256, 16
    $region33: #{tpu_custom_call.1} parent=1 // pred_fallthru
      _
    // Predicated region
    $region34: #{tpu_custom_call.1} parent=1 // pred_check
      _
    $region35: #{tpu_custom_call.1} parent=1 // pred_check_branch
      %379 = sbr.rel (0) target = $region37
    $region36: #{tpu_custom_call.1} parent=1 // pred_region
      %380 = dma.done [#allocation6], 512
    $region37: #{tpu_custom_call.1} parent=1 // pred_fallthru
      _
    %381 = vsyncpa [#allocation5], 1
    %382 = vsyncpa [#allocation6], 1

</llo_original>
